<compile_context>
chip_gen: v6e
topology: v6e:2x2x1
jax: 0.10.0
libtpu: 0.0.40
codegen_flags: <defaults>
</compile_context>

<pallas_src>
import functools

import jax
import jax.numpy as jnp
import numpy as np
from jax.experimental import pallas as pl
from jax.experimental.pallas import tpu as pltpu


def _round_up(v, m):
    return (v + m - 1) // m * m


def _vmem_capacity_bytes():
    # Generation-aware VMEM capacity; conservative fallback = v7x's 64 MiB.
    try:
        info = pltpu.get_tpu_info()
        cap = getattr(info, "vmem_capacity_bytes", None)
        if cap:
            return int(cap)
    except Exception:
        pass
    return 64 * 1024 * 1024


# ---------------------------------------------------------------------------
# Phase 1: per node-tile, accumulate the attention-weighted per-graph sums into
# a VMEM-resident [1, G_pad, C_pad] partial accumulator (one partial per
# "parallel" split).  On the last tile of each split, scale by the precomputed
# inv_counts (linear, so scaling each partial equals scaling the final sum).
# ---------------------------------------------------------------------------
def _segsum_kernel(x_ref, batch_row_ref, w_ref, inv_ref, b_ref, segsum_ref,
                   *, g_pad, c_pad):
    t = pl.program_id(1)  # node-tile ("arbitrary") axis inside this split

    @pl.when(t == 0)
    def _():
        segsum_ref[...] = jnp.zeros_like(segsum_ref)

    x = x_ref[...]                      # [tn, Cp] f32
    w = w_ref[...]                      # [1,  Cp] f32
    b = b_ref[0, 0]                     # SMEM scalar

    # Attention logits: per-128-lane-chunk adds on the VPU, then one cross-lane
    # (XLU) reduce of a [tn, 128] partial.  A width-1 matmul would waste the
    # MXU; a full-width lane reduce would load the XLU C_pad/128x harder.
    xw = x * w
    partial = xw[:, 0:128]
    for ci in range(1, c_pad // 128):
        partial = partial + xw[:, ci * 128:(ci + 1) * 128]
    logits = jnp.sum(partial, axis=-1, keepdims=True) + b        # [tn, 1]
    attn = jax.nn.sigmoid(logits)                                # [tn, 1]
    weighted = x * attn                                          # [tn, Cp]

    # Transposed one-hot [Gp, tn] (graphs on sublanes, node tile on lanes) so
    # jnp.dot contracts its lane axis against weighted's sublane axis with no
    # in-kernel XLU transpose.
    batch_row = batch_row_ref[...]                               # [1, tn] int32
    gids = jax.lax.broadcasted_iota(jnp.int32, (g_pad, batch_row.shape[1]), 0)
    onehot_t = (batch_row == gids).astype(jnp.float32)           # [Gp, tn]

    segsum_ref[0] += jnp.dot(onehot_t, weighted,
                             preferred_element_type=jnp.float32)  # [Gp, Cp]

    @pl.when(t == pl.num_programs(1) - 1)
    def _():
        segsum_ref[0] = segsum_ref[0] * inv_ref[...]             # mean = sum * 1/count


# ---------------------------------------------------------------------------
# Phase 2: per node-tile, gather the per-graph context back to nodes
# (ctx[n] = seg_mean[batch[n]]) as a one-hot matmul, and write the fused
# lane-dense [tile_n, 2*C_pad] output tile ([x | ctx]) -- concat fused here.
# ---------------------------------------------------------------------------
def _gather_concat_kernel(batch_col_ref, x_ref, segmean_ref, out_ref,
                          *, g_pad, c_pad):
    batch_col = batch_col_ref[...]                               # [tn, 1] int32
    gids = jax.lax.broadcasted_iota(jnp.int32, (batch_col.shape[0], g_pad), 1)
    onehot = (batch_col == gids).astype(jnp.float32)             # [tn, Gp]
    ctx = jnp.dot(onehot, segmean_ref[...],
                  preferred_element_type=jnp.float32)            # [tn, Cp]
    # c_pad is a multiple of 128 -> both stores are lane-aligned (no masked
    # partial stores).
    out_ref[:, :c_pad] = x_ref[...]
    out_ref[:, c_pad:] = ctx


def global_attention_layer(x, batch, weight, bias, *, num_graphs):
    """x: [N, C] f32, batch: [N] int32 (assumed 0 <= batch[i] < num_graphs),
    weight: [1, C] f32, bias: [1] f32  ->  [N, 2C] f32."""
    n, c = x.shape
    c_pad = _round_up(c, 128)
    g_pad = _round_up(num_graphs, 128)

    # ---- generation-aware VMEM budget and node-tile size ----
    vmem_cap = _vmem_capacity_bytes()
    vmem_limit = min(int(0.75 * vmem_cap), 96 * 1024 * 1024)
    # Worst per-node-row VMEM cost is phase 2: double-buffered x tile in +
    # double-buffered fused [tn, 2*Cp] tile out.
    per_row_bytes = (2 * c_pad + 2 * 2 * c_pad) * 4
    resident_bytes = 2 * g_pad * c_pad * 4 + 2 * g_pad * 4
    avail = max(vmem_limit - resident_bytes, 128 * per_row_bytes)
    tile_n = max(128, min(1024, (avail // per_row_bytes) // 128 * 128))
    tile_n = min(tile_n, _round_up(n, 128))
    # TODO(synk): for very large num_graphs the resident [G_pad, C_pad]
    # accumulator and full-width one-hots should become block-sparse over
    # sorted `batch` (PrefetchScalarGridSpec with per-tile graph ranges).

    tiles_total = pl.cdiv(n, tile_n)
    num_splits = 2 if tiles_total >= 2 else 1   # megacore split of phase 1 (v7x)
    tiles_per_split = pl.cdiv(tiles_total, num_splits)
    n_pad = num_splits * tiles_per_split * tile_n
    num_tiles = n_pad // tile_n

    x_f32 = x.astype(jnp.float32)
    x_p = jnp.zeros((n_pad, c_pad), jnp.float32).at[:n, :c].set(x_f32)

    # Padded nodes get graph id g_pad (outside the iota range) so their
    # one-hot rows/columns are all zero and they contribute nothing.
    batch_i32 = batch.astype(jnp.int32)
    batch_p = jnp.full((n_pad,), g_pad, jnp.int32).at[:n].set(batch_i32)
    batch_row = batch_p.reshape(1, n_pad)   # lane-major for phase 1
    batch_col = batch_p.reshape(n_pad, 1)   # sublane-major for phase 2

    w_p = jnp.zeros((1, c_pad), jnp.float32).at[:, :c].set(
        weight.astype(jnp.float32).reshape(1, c))
    b_smem = bias.astype(jnp.float32).reshape(1, 1)

    # Per-graph 1/count precomputed here (independent of x): removes the
    # per-tile XLU counts reduce and the counts VMEM scratch from the kernel.
    # (f32 counts are exact up to 2^24 nodes per graph.)
    counts = jax.ops.segment_sum(jnp.ones((n,), jnp.float32), batch_i32,
                                 num_segments=num_graphs)
    inv_counts = 1.0 / jnp.maximum(counts, 1.0)
    inv_p = jnp.zeros((g_pad, 1), jnp.float32).at[:num_graphs, 0].set(inv_counts)

    # ---- phase 1: per-graph attention-weighted mean (num_splits partials) ----
    partials = pl.pallas_call(
        functools.partial(_segsum_kernel, g_pad=g_pad, c_pad=c_pad),
        out_shape=jax.ShapeDtypeStruct((num_splits, g_pad, c_pad), jnp.float32),
        grid=(num_splits, tiles_per_split),
        in_specs=[
            pl.BlockSpec((tile_n, c_pad),
                         lambda p, t: (p * tiles_per_split + t, 0)),   # x tile
            pl.BlockSpec((1, tile_n),
                         lambda p, t: (0, p * tiles_per_split + t)),   # batch row
            pl.BlockSpec((1, c_pad), lambda p, t: (0, 0)),             # weight
            pl.BlockSpec((g_pad, 1), lambda p, t: (0, 0)),             # inv_counts
            pl.BlockSpec(memory_space=pltpu.MemorySpace.SMEM),         # bias scalar
        ],
        out_specs=pl.BlockSpec((1, g_pad, c_pad), lambda p, t: (p, 0, 0)),
        compiler_params=pltpu.CompilerParams(
            dimension_semantics=("parallel", "arbitrary"),
            vmem_limit_bytes=vmem_limit),
        cost_estimate=pl.CostEstimate(
            flops=2 * n_pad * g_pad * c_pad + 4 * n_pad * c_pad,
            transcendentals=n_pad,
            bytes_accessed=4 * (n_pad * c_pad + n_pad + c_pad + g_pad
                                + num_splits * g_pad * c_pad)),
    )(x_p, batch_row, w_p, inv_p, b_smem)

    # Tiny XLA add over the per-core partial accumulators.
    segmean = jnp.sum(partials, axis=0)                                # [Gp, Cp]

    # ---- phase 2: gather per-node context, concat fused into the output ----
    fused = pl.pallas_call(
        functools.partial(_gather_concat_kernel, g_pad=g_pad, c_pad=c_pad),
        out_shape=jax.ShapeDtypeStruct((n_pad, 2 * c_pad), jnp.float32),
        grid=(num_tiles,),
        in_specs=[
            pl.BlockSpec((tile_n, 1), lambda t: (t, 0)),               # batch col
            pl.BlockSpec((tile_n, c_pad), lambda t: (t, 0)),           # x tile
            pl.BlockSpec((g_pad, c_pad), lambda t: (0, 0)),            # seg_mean
        ],
        out_specs=pl.BlockSpec((tile_n, 2 * c_pad), lambda t: (t, 0)),
        compiler_params=pltpu.CompilerParams(
            dimension_semantics=("parallel",),
            vmem_limit_bytes=vmem_limit),
        cost_estimate=pl.CostEstimate(
            flops=2 * n_pad * g_pad * c_pad,
            transcendentals=0,
            bytes_accessed=4 * (n_pad + n_pad * c_pad + g_pad * c_pad
                                + n_pad * 2 * c_pad)),
    )(batch_col, x_p, segmean)

    if c == c_pad:
        return fused[:n]
    # C not lane-aligned: one residual slice-concat in XLA is unavoidable.
    return jnp.concatenate([fused[:n, :c], fused[:n, c_pad:c_pad + c]], axis=-1)


def _reference(x, batch, weight, bias, num_graphs):
    # pure-JAX reference of the PyTorch forward
    attn = jax.nn.sigmoid(x @ weight.T + bias)                  # [N, 1]
    weighted = x * attn
    seg_sum = jax.ops.segment_sum(weighted, batch, num_segments=num_graphs)
    counts = jax.ops.segment_sum(jnp.ones((x.shape[0],)), batch,
                                 num_segments=num_graphs)
    seg_mean = seg_sum / jnp.maximum(counts, 1.0)[:, None]
    return jnp.concatenate([x, seg_mean[batch]], axis=-1)


if __name__ == "__main__":
    N, C, G = 16, 32, 2  # 16 nodes, 32 in_channels, 2 graphs

    key = jax.random.PRNGKey(0)
    kx, kw, kb = jax.random.split(key, 3)
    x = jax.random.normal(kx, (N, C), dtype=jnp.float32)
    batch = jnp.array([0] * (N // 2) + [1] * (N // 2), dtype=jnp.int32)
    # deterministic nn.Linear(C, 1) parameters
    weight = jax.random.normal(kw, (1, C), dtype=jnp.float32) * (1.0 / jnp.sqrt(C))
    bias = jax.random.normal(kb, (1,), dtype=jnp.float32) * 0.1

    out = global_attention_layer(x, batch, weight, bias, num_graphs=G)
    out = jax.block_until_ready(out)

    ref = _reference(x, batch, weight, bias, G)
    np.testing.assert_allclose(np.asarray(out), np.asarray(ref), rtol=1e-5, atol=1e-5)

    print("KERNEL_OK")
</pallas_src>

<mosaic_0001>
module attributes {stable_mosaic.version = 11 : i64} {
  func.func @_segsum_kernel(%arg0: i32, %arg1: i32, %arg2: memref<128x128xf32, #tpu.memory_space<vmem>>, %arg3: memref<1x128xi32, #tpu.memory_space<vmem>>, %arg4: memref<1x128xf32, #tpu.memory_space<vmem>>, %arg5: memref<128x1xf32, #tpu.memory_space<vmem>>, %arg6: memref<1x1xf32, #tpu.memory_space<smem>>, %arg7: memref<1x128x128xf32, #tpu.memory_space<vmem>>) attributes {dimension_semantics = [#tpu.dimension_semantics<parallel>, #tpu.dimension_semantics<arbitrary>], iteration_bounds = array<i64: 1, 1>, scalar_prefetch = 0 : i64, scratch_operands = 0 : i64, tpu.core_type = #tpu.core_type<tc>, window_params = [{transform_indices = @transform_0, window_bounds = array<i64: 128, 128>}, {transform_indices = @transform_1, window_bounds = array<i64: 1, 128>}, {pipeline_mode = #tpu.pipeline_mode<synchronous>, transform_indices = @transform_2, window_bounds = array<i64: 1, 128>}, {pipeline_mode = #tpu.pipeline_mode<synchronous>, transform_indices = @transform_3, window_bounds = array<i64: 128, 1>}, {transform_indices = @transform_4, window_bounds = array<i64: 1, 1>}, {transform_indices = @transform_5, window_bounds = array<i64: 1, 128, 128>}]} {
    %c0_i32 = arith.constant 0 : i32
    %0 = arith.cmpi eq, %arg1, %c0_i32 : i32
    %1 = arith.extui %0 : i1 to i32
    %c0_i32_0 = arith.constant 0 : i32
    %2 = arith.cmpi ne, %1, %c0_i32_0 : i32
    scf.if %2 {
      %cst_18 = arith.constant 0.000000e+00 : f32
      %35 = vector.broadcast %cst_18 : f32 to vector<1x128x128xf32>
      %c0_19 = arith.constant 0 : index
      %c0_20 = arith.constant 0 : index
      %c0_21 = arith.constant 0 : index
      %36 = vector.load %arg7[%c0_19, %c0_20, %c0_21] : memref<1x128x128xf32, #tpu.memory_space<vmem>>, vector<1x128x128xf32>
      tpu.vector_store %arg7[%c0_19, %c0_20, %c0_21], %35 {strides = array<i32>} : memref<1x128x128xf32, #tpu.memory_space<vmem>>, vector<1x128x128xf32>,
    } else {
    }
    %c0 = arith.constant 0 : index
    %c0_1 = arith.constant 0 : index
    %3 = vector.load %arg2[%c0, %c0_1] : memref<128x128xf32, #tpu.memory_space<vmem>>, vector<128x128xf32>
    %c0_2 = arith.constant 0 : index
    %c0_3 = arith.constant 0 : index
    %4 = vector.load %arg4[%c0_2, %c0_3] : memref<1x128xf32, #tpu.memory_space<vmem>>, vector<1x128xf32>
    %c0_4 = arith.constant 0 : index
    %c0_5 = arith.constant 0 : index
    %5 = memref.load %arg6[%c0_4, %c0_5] : memref<1x1xf32, #tpu.memory_space<smem>>
    %6 = vector.broadcast %4 : vector<1x128xf32> to vector<128x128xf32>
    %7 = arith.mulf %3, %6 : vector<128x128xf32>
    %cst = arith.constant dense<0.000000e+00> : vector<128xf32>
    %8 = vector.multi_reduction <add>, %7, %cst [1] : vector<128x128xf32> to vector<128xf32>
    %9 = vector.shape_cast %8 : vector<128xf32> to vector<128x1xf32>
    %10 = vector.broadcast %5 : f32 to vector<128x1xf32>
    %11 = arith.addf %9, %10 : vector<128x1xf32>
    %12 = arith.negf %11 : vector<128x1xf32>
    %13 = math.exp %12 : vector<128x1xf32>
    %cst_6 = arith.constant 1.000000e+00 : f32
    %14 = vector.broadcast %cst_6 : f32 to vector<128x1xf32>
    %15 = arith.addf %14, %13 : vector<128x1xf32>
    %16 = arith.divf %14, %15 : vector<128x1xf32>
    %17 = vector.broadcast %16 : vector<128x1xf32> to vector<128x128xf32>
    %18 = arith.mulf %3, %17 : vector<128x128xf32>
    %c0_7 = arith.constant 0 : index
    %c0_8 = arith.constant 0 : index
    %19 = vector.load %arg3[%c0_7, %c0_8] : memref<1x128xi32, #tpu.memory_space<vmem>>, vector<1x128xi32>
    %20 = tpu.iota {dimensions = array<i32: 0>} : vector<128x128xi32>
    %21 = vector.broadcast %19 : vector<1x128xi32> to vector<128x128xi32>
    %22 = arith.cmpi eq, %21, %20 : vector<128x128xi32>
    %23 = arith.extui %22 : vector<128x128xi1> to vector<128x128xi32>
    %24 = arith.sitofp %23 : vector<128x128xi32> to vector<128x128xf32>
    %c0_9 = arith.constant 0 : index
    %c0_10 = arith.constant 0 : index
    %c0_11 = arith.constant 0 : index
    %25 = vector.load %arg7[%c0_9, %c0_10, %c0_11] : memref<1x128x128xf32, #tpu.memory_space<vmem>>, vector<1x128x128xf32>
    %26 = vector.shape_cast %25 : vector<1x128x128xf32> to vector<128x128xf32>
    %cst_12 = arith.constant dense<0.000000e+00> : vector<128x128xf32>
    %27 = tpu.matmul %24, %18, %cst_12 {dimension_numbers = #tpu.dot_dimension_numbers<[1], [0], [0], [1], [0, 0, 1, 1], [], []>} : vector<128x128xf32>, vector<128x128xf32>, vector<128x128xf32> -> vector<128x128xf32>
    %28 = arith.addf %26, %27 : vector<128x128xf32>
    %c0_13 = arith.constant 0 : index
    %c0_14 = arith.constant 0 : index
    %c0_15 = arith.constant 0 : index
    %29 = vector.load %arg7[%c0_13, %c0_14, %c0_15] : memref<1x128x128xf32, #tpu.memory_space<vmem>>, vector<1x128x128xf32>
    %30 = vector.shape_cast %29 : vector<1x128x128xf32> to vector<128x128xf32>
    %31 = vector.shape_cast %28 : vector<128x128xf32> to vector<1x128x128xf32>
    tpu.vector_store %arg7[%c0_13, %c0_14, %c0_15], %31 {strides = array<i32>} : memref<1x128x128xf32, #tpu.memory_space<vmem>>, vector<1x128x128xf32>,
    %c0_i32_16 = arith.constant 0 : i32
    %32 = arith.cmpi eq, %arg1, %c0_i32_16 : i32
    %33 = arith.extui %32 : i1 to i32
    %c0_i32_17 = arith.constant 0 : i32
    %34 = arith.cmpi ne, %33, %c0_i32_17 : i32
    scf.if %34 {
      %c0_18 = arith.constant 0 : index
      %c0_19 = arith.constant 0 : index
      %c0_20 = arith.constant 0 : index
      %35 = vector.load %arg7[%c0_18, %c0_19, %c0_20] : memref<1x128x128xf32, #tpu.memory_space<vmem>>, vector<1x128x128xf32>
      %36 = vector.shape_cast %35 : vector<1x128x128xf32> to vector<128x128xf32>
      %c0_21 = arith.constant 0 : index
      %c0_22 = arith.constant 0 : index
      %37 = vector.load %arg5[%c0_21, %c0_22] : memref<128x1xf32, #tpu.memory_space<vmem>>, vector<128x1xf32>
      %38 = vector.broadcast %37 : vector<128x1xf32> to vector<128x128xf32>
      %39 = arith.mulf %36, %38 : vector<128x128xf32>
      %c0_23 = arith.constant 0 : index
      %c0_24 = arith.constant 0 : index
      %c0_25 = arith.constant 0 : index
      %40 = vector.load %arg7[%c0_23, %c0_24, %c0_25] : memref<1x128x128xf32, #tpu.memory_space<vmem>>, vector<1x128x128xf32>
      %41 = vector.shape_cast %40 : vector<1x128x128xf32> to vector<128x128xf32>
      %42 = vector.shape_cast %39 : vector<128x128xf32> to vector<1x128x128xf32>
      tpu.vector_store %arg7[%c0_23, %c0_24, %c0_25], %42 {strides = array<i32>} : memref<1x128x128xf32, #tpu.memory_space<vmem>>, vector<1x128x128xf32>,
    } else {
    }
    return
  }
  func.func @transform_0(%arg0: i32, %arg1: i32) -> (i32, i32) {
    %c1_i32 = arith.constant 1 : i32
    %0 = arith.muli %arg0, %c1_i32 : i32
    %1 = arith.addi %0, %arg1 : i32
    %c0_i32 = arith.constant 0 : i32
    %c0_i32_0 = arith.constant 0 : i32
    return %1, %c0_i32 : i32, i32
  }
  func.func @transform_1(%arg0: i32, %arg1: i32) -> (i32, i32) {
    %c1_i32 = arith.constant 1 : i32
    %0 = arith.muli %arg0, %c1_i32 : i32
    %1 = arith.addi %0, %arg1 : i32
    %c0_i32 = arith.constant 0 : i32
    %c0_i32_0 = arith.constant 0 : i32
    return %c0_i32, %1 : i32, i32
  }
  func.func @transform_2(%arg0: i32, %arg1: i32) -> (i32, i32) {
    %c0_i32 = arith.constant 0 : i32
    %c0_i32_0 = arith.constant 0 : i32
    %c0_i32_1 = arith.constant 0 : i32
    return %c0_i32, %c0_i32_0 : i32, i32
  }
  func.func @transform_3(%arg0: i32, %arg1: i32) -> (i32, i32) {
    %c0_i32 = arith.constant 0 : i32
    %c0_i32_0 = arith.constant 0 : i32
    %c0_i32_1 = arith.constant 0 : i32
    return %c0_i32, %c0_i32_0 : i32, i32
  }
  func.func @transform_4(%arg0: i32, %arg1: i32) -> (i32, i32) {
    %c0_i32 = arith.constant 0 : i32
    %c0_i32_0 = arith.constant 0 : i32
    %c0_i32_1 = arith.constant 0 : i32
    return %c0_i32, %c0_i32_0 : i32, i32
  }
  func.func @transform_5(%arg0: i32, %arg1: i32) -> (i32, i32, i32) {
    %c0_i32 = arith.constant 0 : i32
    %c0_i32_0 = arith.constant 0 : i32
    %c0_i32_1 = arith.constant 0 : i32
    return %arg0, %c0_i32, %c0_i32_0 : i32, i32, i32
  }
}

</mosaic_0001>

<llo_original>
// kernel: tpu_custom_call.1
$region0: #{tpu_custom_call.1}
  #allocation0 [shape = 'u32[]', space=smem, size = 0x4, offset = 0x4, fixed_abs, tag = 'smem constant byte address 0x4 - core index']
  #allocation1 [shape = 'u32[144,128]{1,0:T(1,128)}', space=vmem, size = 0x12000, scoped, tag = 'internal scratch']
  #allocation2 [shape = 'f32[1,1]{1,0:T(1,128)S(6)}', space=smem, size = 0x200, scoped, tag = 'scoped memory for tpu_custom_call.1']
  %s0 = inlined_call_operand.vmem [shape: f32[128,128], index: 0, kind: input, shape index: {}]
  %s1 = inlined_call_operand.vmem [shape: s32[1,128], index: 1, kind: input, shape index: {}]
  %s2 = inlined_call_operand.vmem [shape: f32[1,128], index: 2, kind: input, shape index: {}]
  %s3 = inlined_call_operand.vmem [shape: f32[128,1], index: 3, kind: input, shape index: {}]
  %s4 = inlined_call_operand.<no memory space> [shape: f32[1,1], index: 4, kind: input, shape index: {}]
  %s5 = inlined_call_operand.hbm [shape: f32[1,128,128], index: 5, kind: output, shape index: {}]
  %s6 = sld [smem:[#allocation0]]
  $region38: #{tpu_custom_call.1} parent=0
    _
  %s8 = ssub.s32 1, %s6
  %s9 = scalar_select 0, %s8, %s6
  %10 = sst [smem:[#allocation2]] %s4
  $region1: #{tpu_custom_call.1} parent=0
    #allocation3 [shape = 'u8[65536]{0}', space=vmem, size = 0x10000, scoped, tag = 'output window, operand 0, single buffered']
    #allocation4 [shape = 's32[1]{0}', space=sflag, size = 0x4, scoped, tag = 'scoped memory for tpu_custom_call.1']
    %11 = vsyncpa [#allocation4], 0
    // Predicated region
    $region2: #{tpu_custom_call.1} parent=1 // pred_check
      _
    $region3: #{tpu_custom_call.1} parent=1 // pred_check_branch
      %13 = sbr.rel (0) target = $region5
    $region4: #{tpu_custom_call.1} parent=1 // pred_region
      %s14 = sadd.s32 0, 0
      %s15 = smul.u32 16, %s14
      %p16 = scmp.lt.s32.totalorder %s15, 15
      %s17 = scalar_select %p16, %s15, 15
      %s18 = smul.addr %s17, 8
      %s19 = scalar_lea.vmem %s0, %s18
      %s20 = sadd.s32 0, 0
      %s21 = smul.u32 16, %s20
    $region5: #{tpu_custom_call.1} parent=1 // pred_fallthru
      _
    // Predicated region
    $region6: #{tpu_custom_call.1} parent=1 // pred_check
      _
    $region7: #{tpu_custom_call.1} parent=1 // pred_check_branch
      %23 = sbr.rel (0) target = $region9
    $region8: #{tpu_custom_call.1} parent=1 // pred_region
      %s24 = sadd.s32 0, 0
      %p25 = scmp.lt.s32.totalorder %s24, 0
      %s26 = scalar_select %p25, %s24, 0
      %s27 = scalar_lea.vmem %s1, %s26
      %s28 = sadd.s32 0, 0
    $region9: #{tpu_custom_call.1} parent=1 // pred_fallthru
      _
    // Predicated region
    $region10: #{tpu_custom_call.1} parent=1 // pred_check
      _
    $region11: #{tpu_custom_call.1} parent=1 // pred_check_branch
      %30 = sbr.rel (0) target = $region13
    $region12: #{tpu_custom_call.1} parent=1 // pred_region
      _
    $region13: #{tpu_custom_call.1} parent=1 // pred_fallthru
      _
    // Predicated region
    $region14: #{tpu_custom_call.1} parent=1 // pred_check
      _
    $region15: #{tpu_custom_call.1} parent=1 // pred_check_branch
      %32 = sbr.rel (0) target = $region17
    $region16: #{tpu_custom_call.1} parent=1 // pred_region
      _
    $region17: #{tpu_custom_call.1} parent=1 // pred_fallthru
      _
    // Predicated region
    $region18: #{tpu_custom_call.1} parent=1 // pred_check
      _
    $region19: #{tpu_custom_call.1} parent=1 // pred_check_branch
      %34 = sbr.rel (0) target = $region21
    $region20: #{tpu_custom_call.1} parent=1 // pred_region
      _
    $region21: #{tpu_custom_call.1} parent=1 // pred_fallthru
      _
    %s35 = sadd.s32 0, 0
    %s36 = smul.u32 16, %s35
    %p37 = scmp.lt.s32.totalorder %s36, 15
    %s38 = scalar_select %p37, %s36, 15
    %s39 = smul.addr %s38, 8
    %s40 = scalar_lea.vmem %s0, %s39
    %s41 = sadd.s32 0, 0
    %p42 = scmp.lt.s32.totalorder %s41, 0
    %s43 = scalar_select %p42, %s41, 0
    %s44 = scalar_lea.vmem %s1, %s43
    %s45 = sadd.s32 0, 0
    %s46 = smul.u32 16, %s45
    %p47 = scmp.lt.s32.totalorder %s46, 15
    %s48 = scalar_select %p47, %s46, 15
    %s49 = smul.addr %s48, 8
    %s50 = scalar_lea.vmem %s0, %s49
    %s51 = sadd.s32 0, 0
    %s52 = smul.u32 16, %s51
    %s53 = sadd.s32 0, 0
    %p54 = scmp.lt.s32.totalorder %s53, 0
    %s55 = scalar_select %p54, %s53, 0
    %s56 = scalar_lea.vmem %s1, %s55
    %s57 = sadd.s32 0, 0
    %p58 = scmp.eq.s32.totalorder 0, 0
    // Predicated region
    $region22: #{tpu_custom_call.1} parent=1 // pred_check
      %p59 = pneg %p58
    $region23: #{tpu_custom_call.1} parent=1 // pred_check_branch
      %61 = sbr.rel (%p59) target = $region25
    $region24: #{tpu_custom_call.1} parent=1 // pred_region
      %62 = vst [vmem:[#allocation3] sm:$0xff] 0.0
      %63 = vst [vmem:[#allocation3 + $0x8] sm:$0xff] 0.0
      %64 = vst [vmem:[#allocation3 + $0x10] sm:$0xff] 0.0
      %65 = vst [vmem:[#allocation3 + $0x18] sm:$0xff] 0.0
      %66 = vst [vmem:[#allocation3 + $0x20] sm:$0xff] 0.0
      %67 = vst [vmem:[#allocation3 + $0x28] sm:$0xff] 0.0
      %68 = vst [vmem:[#allocation3 + $0x30] sm:$0xff] 0.0
      %69 = vst [vmem:[#allocation3 + $0x38] sm:$0xff] 0.0
      %70 = vst [vmem:[#allocation3 + $0x40] sm:$0xff] 0.0
      %71 = vst [vmem:[#allocation3 + $0x48] sm:$0xff] 0.0
      %72 = vst [vmem:[#allocation3 + $0x50] sm:$0xff] 0.0
      %73 = vst [vmem:[#allocation3 + $0x58] sm:$0xff] 0.0
      %74 = vst [vmem:[#allocation3 + $0x60] sm:$0xff] 0.0
      %75 = vst [vmem:[#allocation3 + $0x68] sm:$0xff] 0.0
      %76 = vst [vmem:[#allocation3 + $0x70] sm:$0xff] 0.0
      %77 = vst [vmem:[#allocation3 + $0x78] sm:$0xff] 0.0
    $region25: #{tpu_custom_call.1} parent=1 // pred_fallthru
      _
    %v78 = vld [vmem:[%s50] sm:$0xff]
    %v79 = vld [vmem:[%s50 + $0x8] sm:$0xff]
    %v80 = vld [vmem:[%s50 + $0x10] sm:$0xff]
    %v81 = vld [vmem:[%s50 + $0x18] sm:$0xff]
    %v82 = vld [vmem:[%s50 + $0x20] sm:$0xff]
    %v83 = vld [vmem:[%s50 + $0x28] sm:$0xff]
    %v84 = vld [vmem:[%s50 + $0x30] sm:$0xff]
    %v85 = vld [vmem:[%s50 + $0x38] sm:$0xff]
    %v86 = vld [vmem:[%s50 + $0x40] sm:$0xff]
    %v87 = vld [vmem:[%s50 + $0x48] sm:$0xff]
    %v88 = vld [vmem:[%s50 + $0x50] sm:$0xff]
    %v89 = vld [vmem:[%s50 + $0x58] sm:$0xff]
    %v90 = vld [vmem:[%s50 + $0x60] sm:$0xff]
    %v91 = vld [vmem:[%s50 + $0x68] sm:$0xff]
    %v92 = vld [vmem:[%s50 + $0x70] sm:$0xff]
    %v93 = vld [vmem:[%s50 + $0x78] sm:$0xff]
    %v94 = vld [vmem:[%s2] sm:$0x1]
    %s95 = sld [smem:[#allocation2]]
    %v97 = vlaneseq
    %v98 = vshrl.u32 %v97, 7
    %v99 = vsub.s32 0, %v98
    %v100 = vrot.slane %v94, %v99
    %v102 = vmul.f32 %v78, %v100
    %v103 = vmul.f32 %v79, %v100
    %v104 = vmul.f32 %v80, %v100
    %v105 = vmul.f32 %v81, %v100
    %v106 = vmul.f32 %v82, %v100
    %v107 = vmul.f32 %v83, %v100
    %v108 = vmul.f32 %v84, %v100
    %v109 = vmul.f32 %v85, %v100
    %v110 = vmul.f32 %v86, %v100
    %v111 = vmul.f32 %v87, %v100
    %v112 = vmul.f32 %v88, %v100
    %v113 = vmul.f32 %v89, %v100
    %v114 = vmul.f32 %v90, %v100
    %v115 = vmul.f32 %v91, %v100
    %v116 = vmul.f32 %v92, %v100
    %v117 = vmul.f32 %v93, %v100
    %118 = vadd.xlane.f32.xlu0 %v102
    %v119 = vpop.xlane.xlu0 %118
    %120 = vadd.xlane.f32.xlu0 %v103
    %v121 = vpop.xlane.xlu0 %120
    %122 = vadd.xlane.f32.xlu0 %v104
    %v123 = vpop.xlane.xlu0 %122
    %124 = vadd.xlane.f32.xlu0 %v105
    %v125 = vpop.xlane.xlu0 %124
    %126 = vadd.xlane.f32.xlu0 %v106
    %v127 = vpop.xlane.xlu0 %126
    %128 = vadd.xlane.f32.xlu0 %v107
    %v129 = vpop.xlane.xlu0 %128
    %130 = vadd.xlane.f32.xlu0 %v108
    %v131 = vpop.xlane.xlu0 %130
    %132 = vadd.xlane.f32.xlu0 %v109
    %v133 = vpop.xlane.xlu0 %132
    %134 = vadd.xlane.f32.xlu0 %v110
    %v135 = vpop.xlane.xlu0 %134
    %136 = vadd.xlane.f32.xlu0 %v111
    %v137 = vpop.xlane.xlu0 %136
    %138 = vadd.xlane.f32.xlu0 %v112
    %v139 = vpop.xlane.xlu0 %138
    %140 = vadd.xlane.f32.xlu0 %v113
    %v141 = vpop.xlane.xlu0 %140
    %142 = vadd.xlane.f32.xlu0 %v114
    %v143 = vpop.xlane.xlu0 %142
    %144 = vadd.xlane.f32.xlu0 %v115
    %v145 = vpop.xlane.xlu0 %144
    %146 = vadd.xlane.f32.xlu0 %v116
    %v147 = vpop.xlane.xlu0 %146
    %148 = vadd.xlane.f32.xlu0 %v117
    %v149 = vpop.xlane.xlu0 %148
    %v150 = vstv %s95
    %v151 = vadd.f32 %v119, %v150
    %v152 = vadd.f32 %v121, %v150
    %v153 = vadd.f32 %v123, %v150
    %v154 = vadd.f32 %v125, %v150
    %v155 = vadd.f32 %v127, %v150
    %v156 = vadd.f32 %v129, %v150
    %v157 = vadd.f32 %v131, %v150
    %v158 = vadd.f32 %v133, %v150
    %v159 = vadd.f32 %v135, %v150
    %v160 = vadd.f32 %v137, %v150
    %v161 = vadd.f32 %v139, %v150
    %v162 = vadd.f32 %v141, %v150
    %v163 = vadd.f32 %v143, %v150
    %v164 = vadd.f32 %v145, %v150
    %v165 = vadd.f32 %v147, %v150
    %v166 = vadd.f32 %v149, %v150
    %v167 = vxor.u32 %v151, 2147483648
    %v168 = vxor.u32 %v152, 2147483648
    %v169 = vxor.u32 %v153, 2147483648
    %v170 = vxor.u32 %v154, 2147483648
    %v171 = vxor.u32 %v155, 2147483648
    %v172 = vxor.u32 %v156, 2147483648
    %v173 = vxor.u32 %v157, 2147483648
    %v174 = vxor.u32 %v158, 2147483648
    %v175 = vxor.u32 %v159, 2147483648
    %v176 = vxor.u32 %v160, 2147483648
    %v177 = vxor.u32 %v161, 2147483648
    %v178 = vxor.u32 %v162, 2147483648
    %v179 = vxor.u32 %v163, 2147483648
    %v180 = vxor.u32 %v164, 2147483648
    %v181 = vxor.u32 %v165, 2147483648
    %v182 = vxor.u32 %v166, 2147483648
    %v183 = vmul.f32 %v167, 1.442695
    %v184 = vpow.pop %v183
    %v185 = vmul.f32 %v168, 1.442695
    %v186 = vpow.pop %v185
    %v187 = vmul.f32 %v169, 1.442695
    %v188 = vpow.pop %v187
    %v189 = vmul.f32 %v170, 1.442695
    %v190 = vpow.pop %v189
    %v191 = vmul.f32 %v171, 1.442695
    %v192 = vpow.pop %v191
    %v193 = vmul.f32 %v172, 1.442695
    %v194 = vpow.pop %v193
    %v195 = vmul.f32 %v173, 1.442695
    %v196 = vpow.pop %v195
    %v197 = vmul.f32 %v174, 1.442695
    %v198 = vpow.pop %v197
    %v199 = vmul.f32 %v175, 1.442695
    %v200 = vpow.pop %v199
    %v201 = vmul.f32 %v176, 1.442695
    %v202 = vpow.pop %v201
    %v203 = vmul.f32 %v177, 1.442695
    %v204 = vpow.pop %v203
    %v205 = vmul.f32 %v178, 1.442695
    %v206 = vpow.pop %v205
    %v207 = vmul.f32 %v179, 1.442695
    %v208 = vpow.pop %v207
    %v209 = vmul.f32 %v180, 1.442695
    %v210 = vpow.pop %v209
    %v211 = vmul.f32 %v181, 1.442695
    %v212 = vpow.pop %v211
    %v213 = vmul.f32 %v182, 1.442695
    %v214 = vpow.pop %v213
    %v215 = vadd.f32 %v184, 1.0
    %v216 = vadd.f32 %v186, 1.0
    %v217 = vadd.f32 %v188, 1.0
    %v218 = vadd.f32 %v190, 1.0
    %v219 = vadd.f32 %v192, 1.0
    %v220 = vadd.f32 %v194, 1.0
    %v221 = vadd.f32 %v196, 1.0
    %v222 = vadd.f32 %v198, 1.0
    %v223 = vadd.f32 %v200, 1.0
    %v224 = vadd.f32 %v202, 1.0
    %v225 = vadd.f32 %v204, 1.0
    %v226 = vadd.f32 %v206, 1.0
    %v227 = vadd.f32 %v208, 1.0
    %v228 = vadd.f32 %v210, 1.0
    %v229 = vadd.f32 %v212, 1.0
    %v230 = vadd.f32 %v214, 1.0
    %v231 = vrcp.pop %v215
    %v232 = vmul.f32 1.0, %v231
    %v233 = vrcp.pop %v216
    %v234 = vmul.f32 1.0, %v233
    %v235 = vrcp.pop %v217
    %v236 = vmul.f32 1.0, %v235
    %v237 = vrcp.pop %v218
    %v238 = vmul.f32 1.0, %v237
    %v239 = vrcp.pop %v219
    %v240 = vmul.f32 1.0, %v239
    %v241 = vrcp.pop %v220
    %v242 = vmul.f32 1.0, %v241
    %v243 = vrcp.pop %v221
    %v244 = vmul.f32 1.0, %v243
    %v245 = vrcp.pop %v222
    %v246 = vmul.f32 1.0, %v245
    %v247 = vrcp.pop %v223
    %v248 = vmul.f32 1.0, %v247
    %v249 = vrcp.pop %v224
    %v250 = vmul.f32 1.0, %v249
    %v251 = vrcp.pop %v225
    %v252 = vmul.f32 1.0, %v251
    %v253 = vrcp.pop %v226
    %v254 = vmul.f32 1.0, %v253
    %v255 = vrcp.pop %v227
    %v256 = vmul.f32 1.0, %v255
    %v257 = vrcp.pop %v228
    %v258 = vmul.f32 1.0, %v257
    %v259 = vrcp.pop %v229
    %v260 = vmul.f32 1.0, %v259
    %v261 = vrcp.pop %v230
    %v262 = vmul.f32 1.0, %v261
    %v263 = vmul.f32 %v78, %v232
    %v264 = vmul.f32 %v79, %v234
    %v265 = vmul.f32 %v80, %v236
    %v266 = vmul.f32 %v81, %v238
    %v267 = vmul.f32 %v82, %v240
    %v268 = vmul.f32 %v83, %v242
    %v269 = vmul.f32 %v84, %v244
    %v270 = vmul.f32 %v85, %v246
    %v271 = vmul.f32 %v86, %v248
    %v272 = vmul.f32 %v87, %v250
    %v273 = vmul.f32 %v88, %v252
    %v274 = vmul.f32 %v89, %v254
    %v275 = vmul.f32 %v90, %v256
    %v276 = vmul.f32 %v91, %v258
    %v277 = vmul.f32 %v92, %v260
    %v278 = vmul.f32 %v93, %v262
    %v279 = vld [vmem:[%s56] sm:$0x1]
    %v280 = vlaneseq
    %v281 = vshrl.u32 %v280, 7
    %v282 = vadd.s32 %v281, 8
    %v283 = vadd.s32 %v281, 16
    %v284 = vadd.s32 %v281, 24
    %v285 = vadd.s32 %v281, 32
    %v286 = vadd.s32 %v281, 40
    %v287 = vadd.s32 %v281, 48
    %v288 = vadd.s32 %v281, 56
    %v289 = vadd.s32 %v281, 64
    %v290 = vadd.s32 %v281, 72
    %v291 = vadd.s32 %v281, 80
    %v292 = vadd.s32 %v281, 88
    %v293 = vadd.s32 %v281, 96
    %v294 = vadd.s32 %v281, 104
    %v295 = vadd.s32 %v281, 112
    %v296 = vadd.s32 %v281, 120
    %v297 = vlaneseq
    %v298 = vshrl.u32 %v297, 7
    %v299 = vsub.s32 0, %v298
    %v300 = vrot.slane %v279, %v299
    %vm301 = vcmp.eq.s32.totalorder %v300, %v281
    %vm302 = vcmp.eq.s32.totalorder %v300, %v282
    %vm303 = vcmp.eq.s32.totalorder %v300, %v283
    %vm304 = vcmp.eq.s32.totalorder %v300, %v284
    %vm305 = vcmp.eq.s32.totalorder %v300, %v285
    %vm306 = vcmp.eq.s32.totalorder %v300, %v286
    %vm307 = vcmp.eq.s32.totalorder %v300, %v287
    %vm308 = vcmp.eq.s32.totalorder %v300, %v288
    %vm309 = vcmp.eq.s32.totalorder %v300, %v289
    %vm310 = vcmp.eq.s32.totalorder %v300, %v290
    %vm311 = vcmp.eq.s32.totalorder %v300, %v291
    %vm312 = vcmp.eq.s32.totalorder %v300, %v292
    %vm313 = vcmp.eq.s32.totalorder %v300, %v293
    %vm314 = vcmp.eq.s32.totalorder %v300, %v294
    %vm315 = vcmp.eq.s32.totalorder %v300, %v295
    %vm316 = vcmp.eq.s32.totalorder %v300, %v296
    %v317 = vsel %vm301, 1, 0
    %v318 = vsel %vm302, 1, 0
    %v319 = vsel %vm303, 1, 0
    %v320 = vsel %vm304, 1, 0
    %v321 = vsel %vm305, 1, 0
    %v322 = vsel %vm306, 1, 0
    %v323 = vsel %vm307, 1, 0
    %v324 = vsel %vm308, 1, 0
    %v325 = vsel %vm309, 1, 0
    %v326 = vsel %vm310, 1, 0
    %v327 = vsel %vm311, 1, 0
    %v328 = vsel %vm312, 1, 0
    %v329 = vsel %vm313, 1, 0
    %v330 = vsel %vm314, 1, 0
    %v331 = vsel %vm315, 1, 0
    %v332 = vsel %vm316, 1, 0
    %v333 = vcvt.s32.f32 %v317
    %v334 = vcvt.s32.f32 %v318
    %v335 = vcvt.s32.f32 %v319
    %v336 = vcvt.s32.f32 %v320
    %v337 = vcvt.s32.f32 %v321
    %v338 = vcvt.s32.f32 %v322
    %v339 = vcvt.s32.f32 %v323
    %v340 = vcvt.s32.f32 %v324
    %v341 = vcvt.s32.f32 %v325
    %v342 = vcvt.s32.f32 %v326
    %v343 = vcvt.s32.f32 %v327
    %v344 = vcvt.s32.f32 %v328
    %v345 = vcvt.s32.f32 %v329
    %v346 = vcvt.s32.f32 %v330
    %v347 = vcvt.s32.f32 %v331
    %v348 = vcvt.s32.f32 %v332
    %v349 = vld [vmem:[#allocation3] sm:$0xff]
    %v350 = vld [vmem:[#allocation3 + $0x8] sm:$0xff]
    %v351 = vld [vmem:[#allocation3 + $0x10] sm:$0xff]
    %v352 = vld [vmem:[#allocation3 + $0x18] sm:$0xff]
    %v353 = vld [vmem:[#allocation3 + $0x20] sm:$0xff]
    %v354 = vld [vmem:[#allocation3 + $0x28] sm:$0xff]
    %v355 = vld [vmem:[#allocation3 + $0x30] sm:$0xff]
    %v356 = vld [vmem:[#allocation3 + $0x38] sm:$0xff]
    %v357 = vld [vmem:[#allocation3 + $0x40] sm:$0xff]
    %v358 = vld [vmem:[#allocation3 + $0x48] sm:$0xff]
    %v359 = vld [vmem:[#allocation3 + $0x50] sm:$0xff]
    %v360 = vld [vmem:[#allocation3 + $0x58] sm:$0xff]
    %v361 = vld [vmem:[#allocation3 + $0x60] sm:$0xff]
    %v362 = vld [vmem:[#allocation3 + $0x68] sm:$0xff]
    %v363 = vld [vmem:[#allocation3 + $0x70] sm:$0xff]
    %v364 = vld [vmem:[#allocation3 + $0x78] sm:$0xff]
    %365 = vmatprep.subr.mxu0 0.0
    %366 = vmatpush1.msra.mxu0 %v278
    %367 = vmatprep.subr.mxu0 0.0
    %368 = vmatpush1.msra.mxu0 %v277
    %369 = vmatprep.subr.mxu0 0.0
    %370 = vmatpush1.msra.mxu0 %v276
    %371 = vmatprep.subr.mxu0 0.0
    %372 = vmatpush1.msra.mxu0 %v275
    %373 = vmatprep.subr.mxu0 0.0
    %374 = vmatpush1.msra.mxu0 %v274
    %375 = vmatprep.subr.mxu0 0.0
    %376 = vmatpush1.msra.mxu0 %v273
    %377 = vmatprep.subr.mxu0 0.0
    %378 = vmatpush1.msra.mxu0 %v272
    %379 = vmatprep.subr.mxu0 0.0
    %380 = vmatpush1.msra.mxu0 %v271
    %381 = vmatprep.subr.mxu0 0.0
    %382 = vmatpush1.msra.mxu0 %v270
    %383 = vmatprep.subr.mxu0 0.0
    %384 = vmatpush1.msra.mxu0 %v269
    %385 = vmatprep.subr.mxu0 0.0
    %386 = vmatpush1.msra.mxu0 %v268
    %387 = vmatprep.subr.mxu0 0.0
    %388 = vmatpush1.msra.mxu0 %v267
    %389 = vmatprep.subr.mxu0 0.0
    %390 = vmatpush1.msra.mxu0 %v266
    %391 = vmatprep.subr.mxu0 0.0
    %392 = vmatpush1.msra.mxu0 %v265
    %393 = vmatprep.subr.mxu0 0.0
    %394 = vmatpush1.msra.mxu0 %v264
    %395 = vmatprep.subr.mxu0 0.0
    %396 = vmatpush1.msra.mxu0 %v263
    %397 = vmatprep.subr.mxu0 0.0
    %398 = vmatpush2.msra.mxu0 0.0
    %399 = vmatprep.subr.mxu0 0.0
    %400 = vmatpush2.msra.mxu0 0.0
    %401 = vmatprep.subr.mxu0 0.0
    %402 = vmatpush2.msra.mxu0 0.0
    %403 = vmatprep.subr.mxu0 0.0
    %404 = vmatpush2.msra.mxu0 0.0
    %405 = vmatprep.subr.mxu0 0.0
    %406 = vmatpush2.msra.mxu0 0.0
    %407 = vmatprep.subr.mxu0 0.0
    %408 = vmatpush2.msra.mxu0 0.0
    %409 = vmatprep.subr.mxu0 0.0
    %410 = vmatpush2.msra.mxu0 0.0
    %411 = vmatprep.subr.mxu0 0.0
    %412 = vmatpush2.msra.mxu0 0.0
    %413 = vmatprep.subr.mxu0 0.0
    %414 = vmatpush2.msra.mxu0 0.0
    %415 = vmatprep.subr.mxu0 0.0
    %416 = vmatpush2.msra.mxu0 0.0
    %417 = vmatprep.subr.mxu0 0.0
    %418 = vmatpush2.msra.mxu0 0.0
    %419 = vmatprep.subr.mxu0 0.0
    %420 = vmatpush2.msra.mxu0 0.0
    %421 = vmatprep.subr.mxu0 0.0
    %422 = vmatpush2.msra.mxu0 0.0
    %423 = vmatprep.subr.mxu0 0.0
    %424 = vmatpush2.msra.mxu0 0.0
    %425 = vmatprep.subr.mxu0 0.0
    %426 = vmatpush2.msra.mxu0 0.0
    %427 = vmatprep.subr.mxu0 0.0
    %428 = vmatpush2.msra.mxu0 0.0
    %429 = vmatprep.mubr.f32.mxu0 0.0
    %430 = vmatmul.mubr.f32.gmra.mxu0 %v333
    %v431 = vpop.f32.mrf.mxu0
    %v432 = vadd.f32 0.0, %v431
    %v433 = vpop.f32.mrf.mxu0
    %434 = vmatprep.mubr.f32.mxu0 0.0
    %435 = vmatmul.mubr.f32.gmra.mxu0 %v334
    %v436 = vpop.f32.mrf.mxu0
    %v437 = vadd.f32 0.0, %v436
    %v438 = vpop.f32.mrf.mxu0
    %439 = vmatprep.mubr.f32.mxu0 0.0
    %440 = vmatmul.mubr.f32.gmra.mxu0 %v335
    %v441 = vpop.f32.mrf.mxu0
    %v442 = vadd.f32 0.0, %v441
    %v443 = vpop.f32.mrf.mxu0
    %444 = vmatprep.mubr.f32.mxu0 0.0
    %445 = vmatmul.mubr.f32.gmra.mxu0 %v336
    %v446 = vpop.f32.mrf.mxu0
    %v447 = vadd.f32 0.0, %v446
    %v448 = vpop.f32.mrf.mxu0
    %449 = vmatprep.mubr.f32.mxu0 0.0
    %450 = vmatmul.mubr.f32.gmra.mxu0 %v337
    %v451 = vpop.f32.mrf.mxu0
    %v452 = vadd.f32 0.0, %v451
    %v453 = vpop.f32.mrf.mxu0
    %454 = vmatprep.mubr.f32.mxu0 0.0
    %455 = vmatmul.mubr.f32.gmra.mxu0 %v338
    %v456 = vpop.f32.mrf.mxu0
    %v457 = vadd.f32 0.0, %v456
    %v458 = vpop.f32.mrf.mxu0
    %459 = vmatprep.mubr.f32.mxu0 0.0
    %460 = vmatmul.mubr.f32.gmra.mxu0 %v339
    %v461 = vpop.f32.mrf.mxu0
    %v462 = vadd.f32 0.0, %v461
    %v463 = vpop.f32.mrf.mxu0
    %464 = vmatprep.mubr.f32.mxu0 0.0
    %465 = vmatmul.mubr.f32.gmra.mxu0 %v340
    %v466 = vpop.f32.mrf.mxu0
    %v467 = vadd.f32 0.0, %v466
    %v468 = vpop.f32.mrf.mxu0
    %469 = vmatprep.mubr.f32.mxu0 0.0
    %470 = vmatmul.mubr.f32.gmra.mxu0 %v341
    %v471 = vpop.f32.mrf.mxu0
    %v472 = vadd.f32 0.0, %v471
    %v473 = vpop.f32.mrf.mxu0
    %474 = vmatprep.mubr.f32.mxu0 0.0
    %475 = vmatmul.mubr.f32.gmra.mxu0 %v342
    %v476 = vpop.f32.mrf.mxu0
    %v477 = vadd.f32 0.0, %v476
    %v478 = vpop.f32.mrf.mxu0
    %479 = vmatprep.mubr.f32.mxu0 0.0
    %480 = vmatmul.mubr.f32.gmra.mxu0 %v343
    %v481 = vpop.f32.mrf.mxu0
    %v482 = vadd.f32 0.0, %v481
    %v483 = vpop.f32.mrf.mxu0
    %484 = vmatprep.mubr.f32.mxu0 0.0
    %485 = vmatmul.mubr.f32.gmra.mxu0 %v344
    %v486 = vpop.f32.mrf.mxu0
    %v487 = vadd.f32 0.0, %v486
    %v488 = vpop.f32.mrf.mxu0
    %489 = vmatprep.mubr.f32.mxu0 0.0
    %490 = vmatmul.mubr.f32.gmra.mxu0 %v345
    %v491 = vpop.f32.mrf.mxu0
    %v492 = vadd.f32 0.0, %v491
    %v493 = vpop.f32.mrf.mxu0
    %494 = vmatprep.mubr.f32.mxu0 0.0
    %495 = vmatmul.mubr.f32.gmra.mxu0 %v346
    %v496 = vpop.f32.mrf.mxu0
    %v497 = vadd.f32 0.0, %v496
    %v498 = vpop.f32.mrf.mxu0
    %499 = vmatprep.mubr.f32.mxu0 0.0
    %500 = vmatmul.mubr.f32.gmra.mxu0 %v347
    %v501 = vpop.f32.mrf.mxu0
    %v502 = vadd.f32 0.0, %v501
    %v503 = vpop.f32.mrf.mxu0
    %504 = vmatprep.mubr.f32.mxu0 0.0
    %505 = vmatmul.mubr.f32.gmra.mxu0 %v348
    %v506 = vpop.f32.mrf.mxu0
    %v507 = vadd.f32 0.0, %v506
    %v508 = vpop.f32.mrf.mxu0
    %509 = vdwg.mxu0
    %v510 = vadd.f32 %v349, %v432
    %v511 = vadd.f32 %v350, %v437
    %v512 = vadd.f32 %v351, %v442
    %v513 = vadd.f32 %v352, %v447
    %v514 = vadd.f32 %v353, %v452
    %v515 = vadd.f32 %v354, %v457
    %v516 = vadd.f32 %v355, %v462
    %v517 = vadd.f32 %v356, %v467
    %v518 = vadd.f32 %v357, %v472
    %v519 = vadd.f32 %v358, %v477
    %v520 = vadd.f32 %v359, %v482
    %v521 = vadd.f32 %v360, %v487
    %v522 = vadd.f32 %v361, %v492
    %v523 = vadd.f32 %v362, %v497
    %v524 = vadd.f32 %v363, %v502
    %v525 = vadd.f32 %v364, %v507
    %526 = vst [vmem:[#allocation3] sm:$0xff] %v510
    %527 = vst [vmem:[#allocation3 + $0x8] sm:$0xff] %v511
    %528 = vst [vmem:[#allocation3 + $0x10] sm:$0xff] %v512
    %529 = vst [vmem:[#allocation3 + $0x18] sm:$0xff] %v513
    %530 = vst [vmem:[#allocation3 + $0x20] sm:$0xff] %v514
    %531 = vst [vmem:[#allocation3 + $0x28] sm:$0xff] %v515
    %532 = vst [vmem:[#allocation3 + $0x30] sm:$0xff] %v516
    %533 = vst [vmem:[#allocation3 + $0x38] sm:$0xff] %v517
    %534 = vst [vmem:[#allocation3 + $0x40] sm:$0xff] %v518
    %535 = vst [vmem:[#allocation3 + $0x48] sm:$0xff] %v519
    %536 = vst [vmem:[#allocation3 + $0x50] sm:$0xff] %v520
    %537 = vst [vmem:[#allocation3 + $0x58] sm:$0xff] %v521
    %538 = vst [vmem:[#allocation3 + $0x60] sm:$0xff] %v522
    %539 = vst [vmem:[#allocation3 + $0x68] sm:$0xff] %v523
    %540 = vst [vmem:[#allocation3 + $0x70] sm:$0xff] %v524
    %541 = vst [vmem:[#allocation3 + $0x78] sm:$0xff] %v525
    // Predicated region
    $region26: #{tpu_custom_call.1} parent=1 // pred_check
      %p542 = pneg %p58
    $region27: #{tpu_custom_call.1} parent=1 // pred_check_branch
      %544 = sbr.rel (%p542) target = $region29
    $region28: #{tpu_custom_call.1} parent=1 // pred_region
      %v545 = vld [vmem:[#allocation3] sm:$0xff]
      %v546 = vld [vmem:[#allocation3 + $0x8] sm:$0xff]
      %v547 = vld [vmem:[#allocation3 + $0x10] sm:$0xff]
      %v548 = vld [vmem:[#allocation3 + $0x18] sm:$0xff]
      %v549 = vld [vmem:[#allocation3 + $0x20] sm:$0xff]
      %v550 = vld [vmem:[#allocation3 + $0x28] sm:$0xff]
      %v551 = vld [vmem:[#allocation3 + $0x30] sm:$0xff]
      %v552 = vld [vmem:[#allocation3 + $0x38] sm:$0xff]
      %v553 = vld [vmem:[#allocation3 + $0x40] sm:$0xff]
      %v554 = vld [vmem:[#allocation3 + $0x48] sm:$0xff]
      %v555 = vld [vmem:[#allocation3 + $0x50] sm:$0xff]
      %v556 = vld [vmem:[#allocation3 + $0x58] sm:$0xff]
      %v557 = vld [vmem:[#allocation3 + $0x60] sm:$0xff]
      %v558 = vld [vmem:[#allocation3 + $0x68] sm:$0xff]
      %v559 = vld [vmem:[#allocation3 + $0x70] sm:$0xff]
      %v560 = vld [vmem:[#allocation3 + $0x78] sm:$0xff]
      %v561 = vld [vmem:[%s3] sm:$0xff]
      %v562 = vld [vmem:[%s3 + $0x8] sm:$0xff]
      %v563 = vld [vmem:[%s3 + $0x10] sm:$0xff]
      %v564 = vld [vmem:[%s3 + $0x18] sm:$0xff]
      %v565 = vld [vmem:[%s3 + $0x20] sm:$0xff]
      %v566 = vld [vmem:[%s3 + $0x28] sm:$0xff]
      %v567 = vld [vmem:[%s3 + $0x30] sm:$0xff]
      %v568 = vld [vmem:[%s3 + $0x38] sm:$0xff]
      %v569 = vld [vmem:[%s3 + $0x40] sm:$0xff]
      %v570 = vld [vmem:[%s3 + $0x48] sm:$0xff]
      %v571 = vld [vmem:[%s3 + $0x50] sm:$0xff]
      %v572 = vld [vmem:[%s3 + $0x58] sm:$0xff]
      %v573 = vld [vmem:[%s3 + $0x60] sm:$0xff]
      %v574 = vld [vmem:[%s3 + $0x68] sm:$0xff]
      %v575 = vld [vmem:[%s3 + $0x70] sm:$0xff]
      %v576 = vld [vmem:[%s3 + $0x78] sm:$0xff]
      %578 = vset.pattern.permute.xlu0 0
      %579 = vperm.xlu0 %578, %v561
      %v580 = vpop.permute.xlu0 %579
      %583 = vset.pattern.permute.xlu0 0
      %584 = vperm.xlu0 %583, %v562
      %v585 = vpop.permute.xlu0 %584
      %588 = vset.pattern.permute.xlu0 0
      %589 = vperm.xlu0 %588, %v563
      %v590 = vpop.permute.xlu0 %589
      %593 = vset.pattern.permute.xlu0 0
      %594 = vperm.xlu0 %593, %v564
      %v595 = vpop.permute.xlu0 %594
      %598 = vset.pattern.permute.xlu0 0
      %599 = vperm.xlu0 %598, %v565
      %v600 = vpop.permute.xlu0 %599
      %603 = vset.pattern.permute.xlu0 0
      %604 = vperm.xlu0 %603, %v566
      %v605 = vpop.permute.xlu0 %604
      %608 = vset.pattern.permute.xlu0 0
      %609 = vperm.xlu0 %608, %v567
      %v610 = vpop.permute.xlu0 %609
      %613 = vset.pattern.permute.xlu0 0
      %614 = vperm.xlu0 %613, %v568
      %v615 = vpop.permute.xlu0 %614
      %618 = vset.pattern.permute.xlu0 0
      %619 = vperm.xlu0 %618, %v569
      %v620 = vpop.permute.xlu0 %619
      %623 = vset.pattern.permute.xlu0 0
      %624 = vperm.xlu0 %623, %v570
      %v625 = vpop.permute.xlu0 %624
      %628 = vset.pattern.permute.xlu0 0
      %629 = vperm.xlu0 %628, %v571
      %v630 = vpop.permute.xlu0 %629
      %633 = vset.pattern.permute.xlu0 0
      %634 = vperm.xlu0 %633, %v572
      %v635 = vpop.permute.xlu0 %634
      %638 = vset.pattern.permute.xlu0 0
      %639 = vperm.xlu0 %638, %v573
      %v640 = vpop.permute.xlu0 %639
      %643 = vset.pattern.permute.xlu0 0
      %644 = vperm.xlu0 %643, %v574
      %v645 = vpop.permute.xlu0 %644
      %648 = vset.pattern.permute.xlu0 0
      %649 = vperm.xlu0 %648, %v575
      %v650 = vpop.permute.xlu0 %649
      %653 = vset.pattern.permute.xlu0 0
      %654 = vperm.xlu0 %653, %v576
      %v655 = vpop.permute.xlu0 %654
      %v657 = vmul.f32 %v545, %v580
      %v658 = vmul.f32 %v546, %v585
      %v659 = vmul.f32 %v547, %v590
      %v660 = vmul.f32 %v548, %v595
      %v661 = vmul.f32 %v549, %v600
      %v662 = vmul.f32 %v550, %v605
      %v663 = vmul.f32 %v551, %v610
      %v664 = vmul.f32 %v552, %v615
      %v665 = vmul.f32 %v553, %v620
      %v666 = vmul.f32 %v554, %v625
      %v667 = vmul.f32 %v555, %v630
      %v668 = vmul.f32 %v556, %v635
      %v669 = vmul.f32 %v557, %v640
      %v670 = vmul.f32 %v558, %v645
      %v671 = vmul.f32 %v559, %v650
      %v672 = vmul.f32 %v560, %v655
      %673 = vst [vmem:[#allocation3] sm:$0xff] %v657
      %674 = vst [vmem:[#allocation3 + $0x8] sm:$0xff] %v658
      %675 = vst [vmem:[#allocation3 + $0x10] sm:$0xff] %v659
      %676 = vst [vmem:[#allocation3 + $0x18] sm:$0xff] %v660
      %677 = vst [vmem:[#allocation3 + $0x20] sm:$0xff] %v661
      %678 = vst [vmem:[#allocation3 + $0x28] sm:$0xff] %v662
      %679 = vst [vmem:[#allocation3 + $0x30] sm:$0xff] %v663
      %680 = vst [vmem:[#allocation3 + $0x38] sm:$0xff] %v664
      %681 = vst [vmem:[#allocation3 + $0x40] sm:$0xff] %v665
      %682 = vst [vmem:[#allocation3 + $0x48] sm:$0xff] %v666
      %683 = vst [vmem:[#allocation3 + $0x50] sm:$0xff] %v667
      %684 = vst [vmem:[#allocation3 + $0x58] sm:$0xff] %v668
      %685 = vst [vmem:[#allocation3 + $0x60] sm:$0xff] %v669
      %686 = vst [vmem:[#allocation3 + $0x68] sm:$0xff] %v670
      %687 = vst [vmem:[#allocation3 + $0x70] sm:$0xff] %v671
      %688 = vst [vmem:[#allocation3 + $0x78] sm:$0xff] %v672
    $region29: #{tpu_custom_call.1} parent=1 // pred_fallthru
      _
    // Predicated region
    $region30: #{tpu_custom_call.1} parent=1 // pred_check
      _
    $region31: #{tpu_custom_call.1} parent=1 // pred_check_branch
      %690 = sbr.rel (0) target = $region33
    $region32: #{tpu_custom_call.1} parent=1 // pred_region
      %s692 = ssub.s32 2048, 2048
      %693 = vsyncadd [#allocation4], %s692
      %s694 = sshll.u32 [#allocation3], 4
      %s695 = int_to_ptr.vmem [resolvable:$true] %s694
      %700 = dma.vmem_to_hbm [thread:$0]  %s695, 2048, %s5, [#allocation4], 128, 128, 8
    $region33: #{tpu_custom_call.1} parent=1 // pred_fallthru
      _
    // Predicated region
    $region34: #{tpu_custom_call.1} parent=1 // pred_check
      _
    $region35: #{tpu_custom_call.1} parent=1 // pred_check_branch
      %702 = sbr.rel (0) target = $region37
    $region36: #{tpu_custom_call.1} parent=1 // pred_region
      %703 = dma.done [#allocation4], 2048
    $region37: #{tpu_custom_call.1} parent=1 // pred_fallthru
      _
    %704 = vsyncpa [#allocation4], 1

</llo_original>
